<compile_context>
chip_gen: v5e
topology: v5e:2x2
jax: 0.10.0
libtpu: 0.0.40
codegen_flags: <defaults>
</compile_context>

<pallas_src>
from functools import partial

import jax
import jax.numpy as jnp
from jax import lax
from jax.experimental import pallas as pl
from jax.experimental.pallas import tpu as pltpu
import numpy as np


def _vq_kernel(x_ref, en2t_ref, e2_ref, q_ref, idx_ref, loss_ref, *, bf16_dist):
    x = x_ref[...]                      # (tn, D) f32
    en2t = en2t_ref[...]                # (K, D)  f32  == (-2 * embed).T
    e2 = e2_ref[...]                    # (1, K)  f32  == ||e_k||^2
    K = e2.shape[1]

    # Distance (up to the per-row constant ||x||^2, which cannot change the
    # argmin): dist = -2 x.e + ||e||^2.  The -2 is baked into the codebook in
    # the wrapper, so no (tn, K) scaling pass is needed here.
    if bf16_dist:
        xe = lax.dot_general(x.astype(jnp.bfloat16), en2t.astype(jnp.bfloat16),
                             (((1,), (1,)), ((), ())),
                             preferred_element_type=jnp.float32)   # (tn, K)
    else:
        xe = lax.dot_general(x, en2t, (((1,), (1,)), ((), ())),
                             preferred_element_type=jnp.float32)   # (tn, K)
    dist = xe + e2                                                 # (tn, K)

    # argmin over the codebook axis (first index on ties, like torch (-d).max(1)).
    iota = lax.broadcasted_iota(jnp.int32, dist.shape, 1)          # (tn, K)
    min_d = jnp.min(dist, axis=-1, keepdims=True)                  # (tn, 1)
    idx_col = jnp.min(jnp.where(dist == min_d, iota, K),
                      axis=-1, keepdims=True)                      # (tn, 1) i32

    # Lane-dense index row: (1, tn).
    idx_ref[...] = jnp.transpose(idx_col, (1, 0))

    # Gather selected codewords via a (-0.5)-valued one-hot against the SAME
    # (-2*embed).T buffer: (-0.5) * (-2*e) == e exactly (power-of-two scales),
    # so the quantized output is bit-exact and no second codebook copy exists.
    sel = jnp.where(iota == idx_col, -0.5, 0.0).astype(jnp.float32)     # (tn, K)
    quant = jnp.dot(sel, en2t, preferred_element_type=jnp.float32)      # (tn, D)
    q_ref[...] = quant.astype(q_ref.dtype)

    # Per-tile partial sum of squared errors (normalized in the wrapper).
    diff = quant - x
    sse = jnp.sum(diff * diff)
    loss_ref[...] = jnp.full(loss_ref.shape, sse, dtype=jnp.float32)


def _vmem_cap_bytes():
    """Physical VMEM of the current generation (fallback: 64 MiB, safe on all)."""
    try:
        info = pltpu.get_tpu_info()
        cap = getattr(info, "vmem_capacity_bytes", None)
        if cap:
            return int(cap)
    except Exception:
        pass
    return 64 * 1024 * 1024


def _vmem_estimate(tn, d, k):
    """Rough per-step VMEM footprint (bytes)."""
    f32 = 4
    x_io = 2 * tn * d * f32          # double-buffered input tile
    q_io = 2 * tn * d * f32          # double-buffered quant output tile
    small_io = 2 * (tn + 128) * 4    # idx + loss blocks
    codebook = (k * d + k) * f32     # single-buffered loop invariants
    interm = 5 * tn * k * f32        # dist / iota / compares / one-hot live values
    return x_io + q_io + small_io + codebook + interm


def _pick_tile(n_rows, d, k, vmem_budget, max_tile=512):
    """Largest batch tile <= max_tile that is a multiple of 128, divides N, and
    fits the VMEM budget; prefers >= 2 grid steps (v7x megacore).  Small or odd
    batches fall back to a single full-batch tile."""
    if n_rows <= 128 or n_rows % 128 != 0:
        return n_rows
    cands = [t for t in range(128, min(n_rows, max_tile) + 1, 128)
             if n_rows % t == 0 and _vmem_estimate(t, d, k) <= vmem_budget]
    if not cands:
        return 128
    multi = [t for t in cands if n_rows // t >= 2]
    return max(multi) if multi else max(cands)


def quantization_forward(x, embed, cluster_size, tn=None, use_bf16_dist=False):
    """Eval-mode forward of QuantizationLayer.

    Returns (quantize, quant_loss, n_small_clusters, embed_ind)."""
    x = x.astype(jnp.float32)
    embed = embed.astype(jnp.float32)
    N, D = x.shape
    D2, K = embed.shape
    assert D2 == D

    cap = _vmem_cap_bytes()
    if tn is None:
        tn = _pick_tile(N, D, K, vmem_budget=int(0.60 * cap))
    assert N % tn == 0
    num_tiles = N // tn

    # Loop-invariant precomputation (done once, outside the grid loop).
    embed_neg2_t = (-2.0 * embed).T                        # (K, D), exact scale
    e2 = jnp.sum(embed * embed, axis=0, keepdims=True)     # (1, K)

    est = _vmem_estimate(tn, D, K)
    vmem_limit = int(min(int(0.85 * cap), max(32 * 1024 * 1024, 2 * est)))

    cost = pl.CostEstimate(
        flops=4 * N * D * K,                               # two (tn,D)x(D,K)-class matmuls
        transcendentals=0,
        bytes_accessed=4 * (2 * N * D + K * D + K + N + 128 * num_tiles),
    )

    quant, idx_row, sse_parts = pl.pallas_call(
        partial(_vq_kernel, bf16_dist=use_bf16_dist),
        out_shape=(
            jax.ShapeDtypeStruct((N, D), x.dtype),
            jax.ShapeDtypeStruct((1, N), jnp.int32),
            jax.ShapeDtypeStruct((1, 128 * num_tiles), jnp.float32),
        ),
        grid_spec=pltpu.PrefetchScalarGridSpec(
            num_scalar_prefetch=0,
            grid=(num_tiles,),
            in_specs=[
                pl.BlockSpec((tn, D), lambda i: (i, 0)),
                pl.BlockSpec((K, D), lambda i: (0, 0),
                             pipeline_mode=pl.Buffered(1)),
                pl.BlockSpec((1, K), lambda i: (0, 0),
                             pipeline_mode=pl.Buffered(1)),
            ],
            out_specs=(
                pl.BlockSpec((tn, D), lambda i: (i, 0)),
                pl.BlockSpec((1, tn), lambda i: (0, i)),
                pl.BlockSpec((1, 128), lambda i: (0, i)),
            ),
        ),
        compiler_params=pltpu.CompilerParams(
            dimension_semantics=("parallel",),
            vmem_limit_bytes=vmem_limit,
        ),
        cost_estimate=cost,
    )(x, embed_neg2_t, e2)

    embed_ind = idx_row[0]                                 # (N,) == x.shape[:-1]
    sse = jnp.sum(sse_parts.reshape(num_tiles, 128)[:, 0]) # exact per-tile partials
    quant_loss = sse * (1.0 / (N * D))                     # static normalization
    quantize = x + lax.stop_gradient(quant - x)            # straight-through
    # NOTE: returned as a traced int32 scalar (torch returns a Python int).
    n_small_clusters = jnp.sum(cluster_size < 1.0).astype(jnp.int32)
    return quantize, quant_loss, n_small_clusters, embed_ind


def reference_forward(x, embed, cluster_size):
    dist = (jnp.sum(x * x, axis=1, keepdims=True)
            - 2.0 * x @ embed
            + jnp.sum(embed * embed, axis=0, keepdims=True))
    embed_ind = jnp.argmin(dist, axis=1)
    quant = embed.T[embed_ind]
    loss = jnp.mean((quant - x) ** 2)
    n_small = jnp.sum(cluster_size < 1.0).astype(jnp.int32)
    return quant, loss, n_small, embed_ind


if __name__ == "__main__":
    key = jax.random.PRNGKey(0)

    def run_case(case_key, N, D, K, tn=None):
        kx, ke, kc = jax.random.split(case_key, 3)
        x = jax.random.normal(kx, (N, D), dtype=jnp.float32)
        # Module inits embed to zeros (degenerate); use a deterministic random
        # codebook instead so the argmin/gather path is exercised.
        embed = jax.random.normal(ke, (D, K), dtype=jnp.float32)
        cluster_size = jax.random.uniform(kc, (K,), dtype=jnp.float32) * 3.0

        out = quantization_forward(x, embed, cluster_size, tn=tn)
        out = jax.block_until_ready(out)
        quantize, quant_loss, n_small, embed_ind = out

        q_ref, l_ref, ns_ref, ind_ref = reference_forward(x, embed, cluster_size)
        np.testing.assert_array_equal(np.asarray(embed_ind), np.asarray(ind_ref))
        np.testing.assert_allclose(np.asarray(quantize), np.asarray(q_ref),
                                   rtol=1e-5, atol=1e-5)
        np.testing.assert_allclose(float(quant_loss), float(l_ref),
                                   rtol=1e-5, atol=1e-5)
        assert int(n_small) == int(ns_ref)

    # Small shapes consistent with the module (single-tile path).
    run_case(jax.random.fold_in(key, 0), N=64, D=32, K=256)
    # Multi-tile path: 2 x 256-row tiles (>= 2 grid steps for v7x megacore),
    # lane-dense idx blocks, partial losses.
    run_case(jax.random.fold_in(key, 1), N=512, D=64, K=512)

    print("KERNEL_OK")
</pallas_src>

<mosaic_0001>
module attributes {stable_mosaic.version = 11 : i64} {
  func.func @_vq_kernel(%arg0: i32, %arg1: memref<64x32xf32, #tpu.memory_space<vmem>>, %arg2: memref<256x32xf32, #tpu.memory_space<vmem>>, %arg3: memref<1x256xf32, #tpu.memory_space<vmem>>, %arg4: memref<64x32xf32, #tpu.memory_space<vmem>>, %arg5: memref<1x64xi32, #tpu.memory_space<vmem>>, %arg6: memref<1x128xf32, #tpu.memory_space<vmem>>) attributes {dimension_semantics = [#tpu.dimension_semantics<parallel>], iteration_bounds = array<i64: 1>, scalar_prefetch = 0 : i64, scratch_operands = 0 : i64, tpu.core_type = #tpu.core_type<tc>, window_params = [{transform_indices = @transform_0, window_bounds = array<i64: 64, 32>}, {pipeline_mode = #tpu.pipeline_mode<synchronous>, transform_indices = @transform_1, window_bounds = array<i64: 256, 32>}, {pipeline_mode = #tpu.pipeline_mode<synchronous>, transform_indices = @transform_2, window_bounds = array<i64: 1, 256>}, {transform_indices = @transform_3, window_bounds = array<i64: 64, 32>}, {transform_indices = @transform_4, window_bounds = array<i64: 1, 64>}, {transform_indices = @transform_5, window_bounds = array<i64: 1, 128>}]} {
    %c0 = arith.constant 0 : index
    %c0_0 = arith.constant 0 : index
    %0 = vector.load %arg1[%c0, %c0_0] : memref<64x32xf32, #tpu.memory_space<vmem>>, vector<64x32xf32>
    %c0_1 = arith.constant 0 : index
    %c0_2 = arith.constant 0 : index
    %1 = vector.load %arg2[%c0_1, %c0_2] : memref<256x32xf32, #tpu.memory_space<vmem>>, vector<256x32xf32>
    %c0_3 = arith.constant 0 : index
    %c0_4 = arith.constant 0 : index
    %2 = vector.load %arg3[%c0_3, %c0_4] : memref<1x256xf32, #tpu.memory_space<vmem>>, vector<1x256xf32>
    %cst = arith.constant dense<0.000000e+00> : vector<64x256xf32>
    %3 = tpu.matmul %0, %1, %cst {dimension_numbers = #tpu.dot_dimension_numbers<[1], [1], [0], [0], [0, 0, 1, 0], [], []>} : vector<64x32xf32>, vector<256x32xf32>, vector<64x256xf32> -> vector<64x256xf32>
    %4 = vector.broadcast %2 : vector<1x256xf32> to vector<64x256xf32>
    %5 = arith.addf %3, %4 : vector<64x256xf32>
    %6 = tpu.iota {dimensions = array<i32: 1>} : vector<64x256xi32>
    %cst_5 = arith.constant dense<0x7F800000> : vector<64xf32>
    %7 = vector.multi_reduction <minimumf>, %5, %cst_5 [1] : vector<64x256xf32> to vector<64xf32>
    %8 = vector.shape_cast %7 : vector<64xf32> to vector<64x1xf32>
    %9 = vector.broadcast %8 : vector<64x1xf32> to vector<64x256xf32>
    %10 = arith.cmpf oeq, %5, %9 : vector<64x256xf32>
    %c256_i32 = arith.constant 256 : i32
    %11 = vector.broadcast %c256_i32 : i32 to vector<64x256xi32>
    %12 = arith.select %10, %6, %11 : vector<64x256xi1>, vector<64x256xi32>
    %cst_6 = arith.constant dense<2147483647> : vector<64xi32>
    %13 = vector.multi_reduction <minsi>, %12, %cst_6 [1] : vector<64x256xi32> to vector<64xi32>
    %14 = vector.shape_cast %13 : vector<64xi32> to vector<64x1xi32>
    %15 = tpu.transpose %14, [1, 0] : vector<64x1xi32> -> vector<1x64xi32>
    %c0_7 = arith.constant 0 : index
    %c0_8 = arith.constant 0 : index
    %16 = vector.load %arg5[%c0_7, %c0_8] : memref<1x64xi32, #tpu.memory_space<vmem>>, vector<1x64xi32>
    tpu.vector_store %arg5[%c0_7, %c0_8], %15 {strides = array<i32>} : memref<1x64xi32, #tpu.memory_space<vmem>>, vector<1x64xi32>,
    %17 = vector.broadcast %14 : vector<64x1xi32> to vector<64x256xi32>
    %18 = arith.cmpi eq, %6, %17 : vector<64x256xi32>
    %cst_9 = arith.constant -5.000000e-01 : f32
    %cst_10 = arith.constant 0.000000e+00 : f32
    %19 = vector.broadcast %cst_9 : f32 to vector<64x256xf32>
    %20 = vector.broadcast %cst_10 : f32 to vector<64x256xf32>
    %21 = arith.select %18, %19, %20 : vector<64x256xi1>, vector<64x256xf32>
    %cst_11 = arith.constant dense<0.000000e+00> : vector<64x32xf32>
    %22 = tpu.matmul %21, %1, %cst_11 {dimension_numbers = #tpu.dot_dimension_numbers<[1], [0], [0], [1], [0, 0, 1, 1], [], []>} : vector<64x256xf32>, vector<256x32xf32>, vector<64x32xf32> -> vector<64x32xf32>
    %c0_12 = arith.constant 0 : index
    %c0_13 = arith.constant 0 : index
    %23 = vector.load %arg4[%c0_12, %c0_13] : memref<64x32xf32, #tpu.memory_space<vmem>>, vector<64x32xf32>
    tpu.vector_store %arg4[%c0_12, %c0_13], %22 {strides = array<i32>} : memref<64x32xf32, #tpu.memory_space<vmem>>, vector<64x32xf32>,
    %24 = arith.subf %22, %0 : vector<64x32xf32>
    %25 = arith.mulf %24, %24 : vector<64x32xf32>
    %26 = vector.shape_cast %25 : vector<64x32xf32> to vector<1x64x32xf32>
    %cst_14 = arith.constant dense<0.000000e+00> : vector<1xf32>
    %27 = vector.multi_reduction <add>, %26, %cst_14 [1, 2] : vector<1x64x32xf32> to vector<1xf32>
    %28 = vector.shape_cast %27 : vector<1xf32> to vector<1x1x1xf32>
    %29 = vector.extract %28[0, 0, 0] : f32 from vector<1x1x1xf32>
    %30 = vector.broadcast %29 : f32 to vector<1x128xf32>
    %c0_15 = arith.constant 0 : index
    %c0_16 = arith.constant 0 : index
    %31 = vector.load %arg6[%c0_15, %c0_16] : memref<1x128xf32, #tpu.memory_space<vmem>>, vector<1x128xf32>
    tpu.vector_store %arg6[%c0_15, %c0_16], %30 {strides = array<i32>} : memref<1x128xf32, #tpu.memory_space<vmem>>, vector<1x128xf32>,
    return
  }
  func.func @transform_0(%arg0: i32) -> (i32, i32) {
    %c0_i32 = arith.constant 0 : i32
    %c0_i32_0 = arith.constant 0 : i32
    return %arg0, %c0_i32 : i32, i32
  }
  func.func @transform_1(%arg0: i32) -> (i32, i32) {
    %c0_i32 = arith.constant 0 : i32
    %c0_i32_0 = arith.constant 0 : i32
    %c0_i32_1 = arith.constant 0 : i32
    return %c0_i32, %c0_i32_0 : i32, i32
  }
  func.func @transform_2(%arg0: i32) -> (i32, i32) {
    %c0_i32 = arith.constant 0 : i32
    %c0_i32_0 = arith.constant 0 : i32
    %c0_i32_1 = arith.constant 0 : i32
    return %c0_i32, %c0_i32_0 : i32, i32
  }
  func.func @transform_3(%arg0: i32) -> (i32, i32) {
    %c0_i32 = arith.constant 0 : i32
    %c0_i32_0 = arith.constant 0 : i32
    return %arg0, %c0_i32 : i32, i32
  }
  func.func @transform_4(%arg0: i32) -> (i32, i32) {
    %c0_i32 = arith.constant 0 : i32
    %c0_i32_0 = arith.constant 0 : i32
    return %c0_i32, %arg0 : i32, i32
  }
  func.func @transform_5(%arg0: i32) -> (i32, i32) {
    %c0_i32 = arith.constant 0 : i32
    %c0_i32_0 = arith.constant 0 : i32
    return %c0_i32, %arg0 : i32, i32
  }
}

</mosaic_0001>

<llo_original>
// kernel: tpu_custom_call.1
$region0: #{tpu_custom_call.1}
  #allocation0 [shape = 'u32[]', space=smem, size = 0x4, offset = 0x4, fixed_abs, tag = 'smem constant byte address 0x4 - core index']
  #allocation1 [shape = 'u32[72,128]{1,0:T(1,128)}', space=vmem, size = 0x9000, scoped, tag = 'internal scratch']
  %s0 = inlined_call_operand.vmem [shape: f32[64,32], index: 0, kind: input, shape index: {}]
  %s1 = inlined_call_operand.vmem [shape: f32[256,32], index: 1, kind: input, shape index: {}]
  %s2 = inlined_call_operand.vmem [shape: f32[1,256], index: 2, kind: input, shape index: {}]
  %s3 = inlined_call_operand.vmem [shape: f32[64,32], index: 3, kind: output, shape index: {0}]
  %s4 = inlined_call_operand.hbm [shape: s32[1,64], index: 4, kind: output, shape index: {1}]
  %s5 = inlined_call_operand.hbm [shape: f32[1,128], index: 5, kind: output, shape index: {2}]
  %6 = xla_tuple %s3, %s4, %s5
  %s7 = sld [smem:[#allocation0]]
  $region38: #{tpu_custom_call.1} parent=0
    _
  %s9 = ssub.s32 1, %s7
  %s10 = scalar_select 0, %s9, %s7
  $region1: #{tpu_custom_call.1} parent=0
    #allocation2 [shape = 'u8[512]{0}', space=vmem, size = 0x400, scoped, tag = 'output window, operand 1, single buffered']
    #allocation3 [shape = 's32[1]{0}', space=sflag, size = 0x4, scoped, tag = 'scoped memory for tpu_custom_call.1']
    #allocation4 [shape = 'u8[512]{0}', space=vmem, size = 0x400, scoped, tag = 'output window, operand 2, single buffered']
    #allocation5 [shape = 's32[1]{0}', space=sflag, size = 0x4, scoped, tag = 'scoped memory for tpu_custom_call.1']
    %11 = vsyncpa [#allocation3], 0
    %12 = vsyncpa [#allocation5], 0
    // Predicated region
    $region2: #{tpu_custom_call.1} parent=1 // pred_check
      _
    $region3: #{tpu_custom_call.1} parent=1 // pred_check_branch
      %14 = sbr.rel (0) target = $region5
    $region4: #{tpu_custom_call.1} parent=1 // pred_region
      _
    $region5: #{tpu_custom_call.1} parent=1 // pred_fallthru
      _
    // Predicated region
    $region6: #{tpu_custom_call.1} parent=1 // pred_check
      _
    $region7: #{tpu_custom_call.1} parent=1 // pred_check_branch
      %16 = sbr.rel (0) target = $region9
    $region8: #{tpu_custom_call.1} parent=1 // pred_region
      _
    $region9: #{tpu_custom_call.1} parent=1 // pred_fallthru
      _
    // Predicated region
    $region10: #{tpu_custom_call.1} parent=1 // pred_check
      _
    $region11: #{tpu_custom_call.1} parent=1 // pred_check_branch
      %18 = sbr.rel (0) target = $region13
    $region12: #{tpu_custom_call.1} parent=1 // pred_region
      _
    $region13: #{tpu_custom_call.1} parent=1 // pred_fallthru
      _
    %v19 = vld [vmem:[%s0] sm:$0xff]
    %v20 = vld [vmem:[%s0 + $0x8] sm:$0xff]
    %v21 = vld [vmem:[%s0 + $0x10] sm:$0xff]
    %v22 = vld [vmem:[%s0 + $0x18] sm:$0xff]
    %v23 = vld [vmem:[%s0 + $0x20] sm:$0xff]
    %v24 = vld [vmem:[%s0 + $0x28] sm:$0xff]
    %v25 = vld [vmem:[%s0 + $0x30] sm:$0xff]
    %v26 = vld [vmem:[%s0 + $0x38] sm:$0xff]
    %v27 = vld [vmem:[%s1] sm:$0xff]
    %v28 = vld [vmem:[%s1 + $0x8] sm:$0xff]
    %v29 = vld [vmem:[%s1 + $0x10] sm:$0xff]
    %v30 = vld [vmem:[%s1 + $0x18] sm:$0xff]
    %v31 = vld [vmem:[%s1 + $0x20] sm:$0xff]
    %v32 = vld [vmem:[%s1 + $0x28] sm:$0xff]
    %v33 = vld [vmem:[%s1 + $0x30] sm:$0xff]
    %v34 = vld [vmem:[%s1 + $0x38] sm:$0xff]
    %v35 = vld [vmem:[%s1 + $0x40] sm:$0xff]
    %v36 = vld [vmem:[%s1 + $0x48] sm:$0xff]
    %v37 = vld [vmem:[%s1 + $0x50] sm:$0xff]
    %v38 = vld [vmem:[%s1 + $0x58] sm:$0xff]
    %v39 = vld [vmem:[%s1 + $0x60] sm:$0xff]
    %v40 = vld [vmem:[%s1 + $0x68] sm:$0xff]
    %v41 = vld [vmem:[%s1 + $0x70] sm:$0xff]
    %v42 = vld [vmem:[%s1 + $0x78] sm:$0xff]
    %v43 = vld [vmem:[%s1 + $0x80] sm:$0xff]
    %v44 = vld [vmem:[%s1 + $0x88] sm:$0xff]
    %v45 = vld [vmem:[%s1 + $0x90] sm:$0xff]
    %v46 = vld [vmem:[%s1 + $0x98] sm:$0xff]
    %v47 = vld [vmem:[%s1 + $0xa0] sm:$0xff]
    %v48 = vld [vmem:[%s1 + $0xa8] sm:$0xff]
    %v49 = vld [vmem:[%s1 + $0xb0] sm:$0xff]
    %v50 = vld [vmem:[%s1 + $0xb8] sm:$0xff]
    %v51 = vld [vmem:[%s1 + $0xc0] sm:$0xff]
    %v52 = vld [vmem:[%s1 + $0xc8] sm:$0xff]
    %v53 = vld [vmem:[%s1 + $0xd0] sm:$0xff]
    %v54 = vld [vmem:[%s1 + $0xd8] sm:$0xff]
    %v55 = vld [vmem:[%s1 + $0xe0] sm:$0xff]
    %v56 = vld [vmem:[%s1 + $0xe8] sm:$0xff]
    %v57 = vld [vmem:[%s1 + $0xf0] sm:$0xff]
    %v58 = vld [vmem:[%s1 + $0xf8] sm:$0xff]
    %v59 = vld [vmem:[%s2] sm:$0x3]
    %v61 = vperm.slane %v59, 0
    %v62 = vperm.slane %v59, 1
    %vm65 = vcmask 261120
    %v67 = vsel %vm65, %v19, 0
    %v70 = vsel %vm65, %v20, 0
    %v73 = vsel %vm65, %v21, 0
    %v76 = vsel %vm65, %v22, 0
    %v79 = vsel %vm65, %v23, 0
    %v82 = vsel %vm65, %v24, 0
    %v85 = vsel %vm65, %v25, 0
    %v88 = vsel %vm65, %v26, 0
    %v91 = vsel %vm65, %v27, 0
    %v94 = vsel %vm65, %v28, 0
    %v97 = vsel %vm65, %v29, 0
    %v100 = vsel %vm65, %v30, 0
    %v103 = vsel %vm65, %v31, 0
    %v106 = vsel %vm65, %v32, 0
    %v109 = vsel %vm65, %v33, 0
    %v112 = vsel %vm65, %v34, 0
    %v115 = vsel %vm65, %v35, 0
    %v118 = vsel %vm65, %v36, 0
    %v121 = vsel %vm65, %v37, 0
    %v124 = vsel %vm65, %v38, 0
    %v127 = vsel %vm65, %v39, 0
    %v130 = vsel %vm65, %v40, 0
    %v133 = vsel %vm65, %v41, 0
    %v136 = vsel %vm65, %v42, 0
    %v139 = vsel %vm65, %v43, 0
    %v142 = vsel %vm65, %v44, 0
    %v145 = vsel %vm65, %v45, 0
    %v148 = vsel %vm65, %v46, 0
    %v151 = vsel %vm65, %v47, 0
    %v154 = vsel %vm65, %v48, 0
    %v157 = vsel %vm65, %v49, 0
    %v160 = vsel %vm65, %v50, 0
    %v163 = vsel %vm65, %v51, 0
    %v166 = vsel %vm65, %v52, 0
    %v169 = vsel %vm65, %v53, 0
    %v172 = vsel %vm65, %v54, 0
    %v175 = vsel %vm65, %v55, 0
    %v178 = vsel %vm65, %v56, 0
    %v181 = vsel %vm65, %v57, 0
    %v184 = vsel %vm65, %v58, 0
    %186 = vmatpush.xpose.msra.mxu0 %v136
    %187 = vmatpush.xpose.msra.mxu0 %v133
    %188 = vmatpush.xpose.msra.mxu0 %v130
    %189 = vmatpush.xpose.msra.mxu0 %v127
    %190 = vmatpush.xpose.msra.mxu0 %v124
    %191 = vmatpush.xpose.msra.mxu0 %v121
    %192 = vmatpush.xpose.msra.mxu0 %v118
    %193 = vmatpush.xpose.msra.mxu0 %v115
    %194 = vmatpush.xpose.msra.mxu0 %v112
    %195 = vmatpush.xpose.msra.mxu0 %v109
    %196 = vmatpush.xpose.msra.mxu0 %v106
    %197 = vmatpush.xpose.msra.mxu0 %v103
    %198 = vmatpush.xpose.msra.mxu0 %v100
    %199 = vmatpush.xpose.msra.mxu0 %v97
    %200 = vmatpush.xpose.msra.mxu0 %v94
    %201 = vmatpush.xpose.msra.mxu0 %v91
    %202 = vmatmul.f32.gmra.mxu0 %v67
    %v203 = vpop.f32.mrf.mxu0
    %v204 = vadd.f32 %v61, %v203
    %205 = vmatmul.f32.gmra.mxu0 %v70
    %v206 = vpop.f32.mrf.mxu0
    %v207 = vadd.f32 %v61, %v206
    %208 = vmatmul.f32.gmra.mxu0 %v73
    %v209 = vpop.f32.mrf.mxu0
    %v210 = vadd.f32 %v61, %v209
    %211 = vmatmul.f32.gmra.mxu0 %v76
    %v212 = vpop.f32.mrf.mxu0
    %v213 = vadd.f32 %v61, %v212
    %214 = vmatmul.f32.gmra.mxu0 %v79
    %v215 = vpop.f32.mrf.mxu0
    %v216 = vadd.f32 %v61, %v215
    %217 = vmatmul.f32.gmra.mxu0 %v82
    %v218 = vpop.f32.mrf.mxu0
    %v219 = vadd.f32 %v61, %v218
    %220 = vmatmul.f32.gmra.mxu0 %v85
    %v221 = vpop.f32.mrf.mxu0
    %v222 = vadd.f32 %v61, %v221
    %223 = vmatmul.f32.gmra.mxu0 %v88
    %v224 = vpop.f32.mrf.mxu0
    %v225 = vadd.f32 %v61, %v224
    %226 = vdwg.mxu0
    %227 = vmatpush.xpose.msra.mxu0 %v184
    %228 = vmatpush.xpose.msra.mxu0 %v181
    %229 = vmatpush.xpose.msra.mxu0 %v178
    %230 = vmatpush.xpose.msra.mxu0 %v175
    %231 = vmatpush.xpose.msra.mxu0 %v172
    %232 = vmatpush.xpose.msra.mxu0 %v169
    %233 = vmatpush.xpose.msra.mxu0 %v166
    %234 = vmatpush.xpose.msra.mxu0 %v163
    %235 = vmatpush.xpose.msra.mxu0 %v160
    %236 = vmatpush.xpose.msra.mxu0 %v157
    %237 = vmatpush.xpose.msra.mxu0 %v154
    %238 = vmatpush.xpose.msra.mxu0 %v151
    %239 = vmatpush.xpose.msra.mxu0 %v148
    %240 = vmatpush.xpose.msra.mxu0 %v145
    %241 = vmatpush.xpose.msra.mxu0 %v142
    %242 = vmatpush.xpose.msra.mxu0 %v139
    %243 = vmatmul.f32.gmra.mxu0 %v67
    %v244 = vpop.f32.mrf.mxu0
    %v245 = vadd.f32 %v62, %v244
    %246 = vmatmul.f32.gmra.mxu0 %v70
    %v247 = vpop.f32.mrf.mxu0
    %v248 = vadd.f32 %v62, %v247
    %249 = vmatmul.f32.gmra.mxu0 %v73
    %v250 = vpop.f32.mrf.mxu0
    %v251 = vadd.f32 %v62, %v250
    %252 = vmatmul.f32.gmra.mxu0 %v76
    %v253 = vpop.f32.mrf.mxu0
    %v254 = vadd.f32 %v62, %v253
    %255 = vmatmul.f32.gmra.mxu0 %v79
    %v256 = vpop.f32.mrf.mxu0
    %v257 = vadd.f32 %v62, %v256
    %258 = vmatmul.f32.gmra.mxu0 %v82
    %v259 = vpop.f32.mrf.mxu0
    %v260 = vadd.f32 %v62, %v259
    %261 = vmatmul.f32.gmra.mxu0 %v85
    %v262 = vpop.f32.mrf.mxu0
    %v263 = vadd.f32 %v62, %v262
    %264 = vmatmul.f32.gmra.mxu0 %v88
    %v265 = vpop.f32.mrf.mxu0
    %v266 = vadd.f32 %v62, %v265
    %267 = vdwg.mxu0
    %v268 = vlaneseq
    %v269 = vand.u32 %v268, 127
    %v270 = vadd.s32 %v269, 128
    %v271 = vmin.f32 %v204, %v245
    %272 = vmin.xlane.f32.xlu0 %v271
    %v273 = vpop.xlane.xlu0 %272
    %v274 = vmin.f32 %v207, %v248
    %275 = vmin.xlane.f32.xlu0 %v274
    %v276 = vpop.xlane.xlu0 %275
    %v277 = vmin.f32 %v210, %v251
    %278 = vmin.xlane.f32.xlu0 %v277
    %v279 = vpop.xlane.xlu0 %278
    %v280 = vmin.f32 %v213, %v254
    %281 = vmin.xlane.f32.xlu0 %v280
    %v282 = vpop.xlane.xlu0 %281
    %v283 = vmin.f32 %v216, %v257
    %284 = vmin.xlane.f32.xlu0 %v283
    %v285 = vpop.xlane.xlu0 %284
    %v286 = vmin.f32 %v219, %v260
    %287 = vmin.xlane.f32.xlu0 %v286
    %v288 = vpop.xlane.xlu0 %287
    %v289 = vmin.f32 %v222, %v263
    %290 = vmin.xlane.f32.xlu0 %v289
    %v291 = vpop.xlane.xlu0 %290
    %v292 = vmin.f32 %v225, %v266
    %293 = vmin.xlane.f32.xlu0 %v292
    %v294 = vpop.xlane.xlu0 %293
    %vm295 = vcmp.eq.f32.partialorder %v204, %v273
    %vm296 = vcmp.eq.f32.partialorder %v245, %v273
    %vm297 = vcmp.eq.f32.partialorder %v207, %v276
    %vm298 = vcmp.eq.f32.partialorder %v248, %v276
    %vm299 = vcmp.eq.f32.partialorder %v210, %v279
    %vm300 = vcmp.eq.f32.partialorder %v251, %v279
    %vm301 = vcmp.eq.f32.partialorder %v213, %v282
    %vm302 = vcmp.eq.f32.partialorder %v254, %v282
    %vm303 = vcmp.eq.f32.partialorder %v216, %v285
    %vm304 = vcmp.eq.f32.partialorder %v257, %v285
    %vm305 = vcmp.eq.f32.partialorder %v219, %v288
    %vm306 = vcmp.eq.f32.partialorder %v260, %v288
    %vm307 = vcmp.eq.f32.partialorder %v222, %v291
    %vm308 = vcmp.eq.f32.partialorder %v263, %v291
    %vm309 = vcmp.eq.f32.partialorder %v225, %v294
    %vm310 = vcmp.eq.f32.partialorder %v266, %v294
    %v311 = vsel %vm295, %v269, 256
    %v312 = vsel %vm296, %v270, 256
    %v313 = vsel %vm297, %v269, 256
    %v314 = vsel %vm298, %v270, 256
    %v315 = vsel %vm299, %v269, 256
    %v316 = vsel %vm300, %v270, 256
    %v317 = vsel %vm301, %v269, 256
    %v318 = vsel %vm302, %v270, 256
    %v319 = vsel %vm303, %v269, 256
    %v320 = vsel %vm304, %v270, 256
    %v321 = vsel %vm305, %v269, 256
    %v322 = vsel %vm306, %v270, 256
    %v323 = vsel %vm307, %v269, 256
    %v324 = vsel %vm308, %v270, 256
    %v325 = vsel %vm309, %v269, 256
    %v326 = vsel %vm310, %v270, 256
    %vm327 = vcmp.lt.s32.totalorder %v311, %v312
    %v328 = vsel %vm327, %v311, %v312
    %v329 = vand.u32 %v328, 65535
    %v330 = vshra.s32 %v328, 16
    %v331 = vcvt.s32.f32 %v329
    %v332 = vcvt.s32.f32 %v330
    %333 = vmin.xlane.f32.xlu0 %v332
    %v334 = vpop.xlane.xlu0 %333
    %vm335 = vcmp.eq.f32.partialorder %v332, %v334
    %v336 = vsel %vm335, %v331, inf
    %337 = vmin.xlane.f32.xlu0 %v336
    %v338 = vpop.xlane.xlu0 %337
    %v339 = vcvt.f32.s32 %v338
    %v340 = vcvt.f32.s32 %v334
    %v341 = vshll.u32 %v340, 16
    %v342 = vadd.s32 %v341, %v339
    %vm343 = vcmp.lt.s32.totalorder %v313, %v314
    %v344 = vsel %vm343, %v313, %v314
    %v345 = vand.u32 %v344, 65535
    %v346 = vshra.s32 %v344, 16
    %v347 = vcvt.s32.f32 %v345
    %v348 = vcvt.s32.f32 %v346
    %349 = vmin.xlane.f32.xlu0 %v348
    %v350 = vpop.xlane.xlu0 %349
    %vm351 = vcmp.eq.f32.partialorder %v348, %v350
    %v352 = vsel %vm351, %v347, inf
    %353 = vmin.xlane.f32.xlu0 %v352
    %v354 = vpop.xlane.xlu0 %353
    %v355 = vcvt.f32.s32 %v354
    %v356 = vcvt.f32.s32 %v350
    %v357 = vshll.u32 %v356, 16
    %v358 = vadd.s32 %v357, %v355
    %vm359 = vcmp.lt.s32.totalorder %v315, %v316
    %v360 = vsel %vm359, %v315, %v316
    %v361 = vand.u32 %v360, 65535
    %v362 = vshra.s32 %v360, 16
    %v363 = vcvt.s32.f32 %v361
    %v364 = vcvt.s32.f32 %v362
    %365 = vmin.xlane.f32.xlu0 %v364
    %v366 = vpop.xlane.xlu0 %365
    %vm367 = vcmp.eq.f32.partialorder %v364, %v366
    %v368 = vsel %vm367, %v363, inf
    %369 = vmin.xlane.f32.xlu0 %v368
    %v370 = vpop.xlane.xlu0 %369
    %v371 = vcvt.f32.s32 %v370
    %v372 = vcvt.f32.s32 %v366
    %v373 = vshll.u32 %v372, 16
    %v374 = vadd.s32 %v373, %v371
    %vm375 = vcmp.lt.s32.totalorder %v317, %v318
    %v376 = vsel %vm375, %v317, %v318
    %v377 = vand.u32 %v376, 65535
    %v378 = vshra.s32 %v376, 16
    %v379 = vcvt.s32.f32 %v377
    %v380 = vcvt.s32.f32 %v378
    %381 = vmin.xlane.f32.xlu0 %v380
    %v382 = vpop.xlane.xlu0 %381
    %vm383 = vcmp.eq.f32.partialorder %v380, %v382
    %v384 = vsel %vm383, %v379, inf
    %385 = vmin.xlane.f32.xlu0 %v384
    %v386 = vpop.xlane.xlu0 %385
    %v387 = vcvt.f32.s32 %v386
    %v388 = vcvt.f32.s32 %v382
    %v389 = vshll.u32 %v388, 16
    %v390 = vadd.s32 %v389, %v387
    %vm391 = vcmp.lt.s32.totalorder %v319, %v320
    %v392 = vsel %vm391, %v319, %v320
    %v393 = vand.u32 %v392, 65535
    %v394 = vshra.s32 %v392, 16
    %v395 = vcvt.s32.f32 %v393
    %v396 = vcvt.s32.f32 %v394
    %397 = vmin.xlane.f32.xlu0 %v396
    %v398 = vpop.xlane.xlu0 %397
    %vm399 = vcmp.eq.f32.partialorder %v396, %v398
    %v400 = vsel %vm399, %v395, inf
    %401 = vmin.xlane.f32.xlu0 %v400
    %v402 = vpop.xlane.xlu0 %401
    %v403 = vcvt.f32.s32 %v402
    %v404 = vcvt.f32.s32 %v398
    %v405 = vshll.u32 %v404, 16
    %v406 = vadd.s32 %v405, %v403
    %vm407 = vcmp.lt.s32.totalorder %v321, %v322
    %v408 = vsel %vm407, %v321, %v322
    %v409 = vand.u32 %v408, 65535
    %v410 = vshra.s32 %v408, 16
    %v411 = vcvt.s32.f32 %v409
    %v412 = vcvt.s32.f32 %v410
    %413 = vmin.xlane.f32.xlu0 %v412
    %v414 = vpop.xlane.xlu0 %413
    %vm415 = vcmp.eq.f32.partialorder %v412, %v414
    %v416 = vsel %vm415, %v411, inf
    %417 = vmin.xlane.f32.xlu0 %v416
    %v418 = vpop.xlane.xlu0 %417
    %v419 = vcvt.f32.s32 %v418
    %v420 = vcvt.f32.s32 %v414
    %v421 = vshll.u32 %v420, 16
    %v422 = vadd.s32 %v421, %v419
    %vm423 = vcmp.lt.s32.totalorder %v323, %v324
    %v424 = vsel %vm423, %v323, %v324
    %v425 = vand.u32 %v424, 65535
    %v426 = vshra.s32 %v424, 16
    %v427 = vcvt.s32.f32 %v425
    %v428 = vcvt.s32.f32 %v426
    %429 = vmin.xlane.f32.xlu0 %v428
    %v430 = vpop.xlane.xlu0 %429
    %vm431 = vcmp.eq.f32.partialorder %v428, %v430
    %v432 = vsel %vm431, %v427, inf
    %433 = vmin.xlane.f32.xlu0 %v432
    %v434 = vpop.xlane.xlu0 %433
    %v435 = vcvt.f32.s32 %v434
    %v436 = vcvt.f32.s32 %v430
    %v437 = vshll.u32 %v436, 16
    %v438 = vadd.s32 %v437, %v435
    %vm439 = vcmp.lt.s32.totalorder %v325, %v326
    %v440 = vsel %vm439, %v325, %v326
    %v441 = vand.u32 %v440, 65535
    %v442 = vshra.s32 %v440, 16
    %v443 = vcvt.s32.f32 %v441
    %v444 = vcvt.s32.f32 %v442
    %445 = vmin.xlane.f32.xlu0 %v444
    %v446 = vpop.xlane.xlu0 %445
    %vm447 = vcmp.eq.f32.partialorder %v444, %v446
    %v448 = vsel %vm447, %v443, inf
    %449 = vmin.xlane.f32.xlu0 %v448
    %v450 = vpop.xlane.xlu0 %449
    %v451 = vcvt.f32.s32 %v450
    %v452 = vcvt.f32.s32 %v446
    %v453 = vshll.u32 %v452, 16
    %v454 = vadd.s32 %v453, %v451
    %455 = vxpose.xlu0.b32.start [1/16] %v342, 128
    %456 = vxpose.xlu0.b32.cont [2/16] %v358, 128
    %457 = vxpose.xlu0.b32.cont [3/16] %v374, 128
    %458 = vxpose.xlu0.b32.cont [4/16] %v390, 128
    %459 = vxpose.xlu0.b32.cont [5/16] %v406, 128
    %460 = vxpose.xlu0.b32.cont [6/16] %v422, 128
    %461 = vxpose.xlu0.b32.cont [7/16] %v438, 128
    %462 = vxpose.xlu0.b32.cont [8/16] %v454, 128
    %463 = vxpose.xlu0.b32.cont [9/16] 0, 128
    %464 = vxpose.xlu0.b32.cont [10/16] 0, 128
    %465 = vxpose.xlu0.b32.cont [11/16] 0, 128
    %466 = vxpose.xlu0.b32.cont [12/16] 0, 128
    %467 = vxpose.xlu0.b32.cont [13/16] 0, 128
    %468 = vxpose.xlu0.b32.cont [14/16] 0, 128
    %469 = vxpose.xlu0.b32.cont [15/16] 0, 128
    %470 = vxpose.xlu0.b32.end [16/16] 0, 128
    %v471 = vpop.trf.xlu0
    %v472 = vpop.trf.xlu0
    %v473 = vpop.trf.xlu0
    %v474 = vpop.trf.xlu0
    %v475 = vpop.trf.xlu0
    %v476 = vpop.trf.xlu0
    %v477 = vpop.trf.xlu0
    %v478 = vpop.trf.xlu0
    %v479 = vpop.trf.xlu0
    %v480 = vpop.trf.xlu0
    %v481 = vpop.trf.xlu0
    %v482 = vpop.trf.xlu0
    %v483 = vpop.trf.xlu0
    %v484 = vpop.trf.xlu0
    %v485 = vpop.trf.xlu0
    %v486 = vpop.trf.xlu0
    %vm487 = vcmask 516096
    %488 = vst.msk [vmem:[#allocation2] sm:$0x1] %vm487, %v471
    %vm489 = vcmp.eq.s32.totalorder %v269, %v342
    %vm490 = vcmp.eq.s32.totalorder %v270, %v342
    %vm491 = vcmp.eq.s32.totalorder %v269, %v358
    %vm492 = vcmp.eq.s32.totalorder %v270, %v358
    %vm493 = vcmp.eq.s32.totalorder %v269, %v374
    %vm494 = vcmp.eq.s32.totalorder %v270, %v374
    %vm495 = vcmp.eq.s32.totalorder %v269, %v390
    %vm496 = vcmp.eq.s32.totalorder %v270, %v390
    %vm497 = vcmp.eq.s32.totalorder %v269, %v406
    %vm498 = vcmp.eq.s32.totalorder %v270, %v406
    %vm499 = vcmp.eq.s32.totalorder %v269, %v422
    %vm500 = vcmp.eq.s32.totalorder %v270, %v422
    %vm501 = vcmp.eq.s32.totalorder %v269, %v438
    %vm502 = vcmp.eq.s32.totalorder %v270, %v438
    %vm503 = vcmp.eq.s32.totalorder %v269, %v454
    %vm504 = vcmp.eq.s32.totalorder %v270, %v454
    %v505 = vsel %vm489, -0.5, 0.0
    %v506 = vsel %vm490, -0.5, 0.0
    %v507 = vsel %vm491, -0.5, 0.0
    %v508 = vsel %vm492, -0.5, 0.0
    %v509 = vsel %vm493, -0.5, 0.0
    %v510 = vsel %vm494, -0.5, 0.0
    %v511 = vsel %vm495, -0.5, 0.0
    %v512 = vsel %vm496, -0.5, 0.0
    %v513 = vsel %vm497, -0.5, 0.0
    %v514 = vsel %vm498, -0.5, 0.0
    %v515 = vsel %vm499, -0.5, 0.0
    %v516 = vsel %vm500, -0.5, 0.0
    %v517 = vsel %vm501, -0.5, 0.0
    %v518 = vsel %vm502, -0.5, 0.0
    %v519 = vsel %vm503, -0.5, 0.0
    %v520 = vsel %vm504, -0.5, 0.0
    %521 = vmatpush.msra.mxu0 %v42
    %522 = vmatpush.msra.mxu0 %v41
    %523 = vmatpush.msra.mxu0 %v40
    %524 = vmatpush.msra.mxu0 %v39
    %525 = vmatpush.msra.mxu0 %v38
    %526 = vmatpush.msra.mxu0 %v37
    %527 = vmatpush.msra.mxu0 %v36
    %528 = vmatpush.msra.mxu0 %v35
    %529 = vmatpush.msra.mxu0 %v34
    %530 = vmatpush.msra.mxu0 %v33
    %531 = vmatpush.msra.mxu0 %v32
    %532 = vmatpush.msra.mxu0 %v31
    %533 = vmatpush.msra.mxu0 %v30
    %534 = vmatpush.msra.mxu0 %v29
    %535 = vmatpush.msra.mxu0 %v28
    %536 = vmatpush.msra.mxu0 %v27
    %537 = vmatmul.f32.gmra.mxu0 %v505
    %v538 = vpop.f32.mrf.mxu0
    %v539 = vadd.f32 0.0, %v538
    %540 = vmatmul.f32.gmra.mxu0 %v507
    %v541 = vpop.f32.mrf.mxu0
    %v542 = vadd.f32 0.0, %v541
    %543 = vmatmul.f32.gmra.mxu0 %v509
    %v544 = vpop.f32.mrf.mxu0
    %v545 = vadd.f32 0.0, %v544
    %546 = vmatmul.f32.gmra.mxu0 %v511
    %v547 = vpop.f32.mrf.mxu0
    %v548 = vadd.f32 0.0, %v547
    %549 = vmatmul.f32.gmra.mxu0 %v513
    %v550 = vpop.f32.mrf.mxu0
    %v551 = vadd.f32 0.0, %v550
    %552 = vmatmul.f32.gmra.mxu0 %v515
    %v553 = vpop.f32.mrf.mxu0
    %v554 = vadd.f32 0.0, %v553
    %555 = vmatmul.f32.gmra.mxu0 %v517
    %v556 = vpop.f32.mrf.mxu0
    %v557 = vadd.f32 0.0, %v556
    %558 = vmatmul.f32.gmra.mxu0 %v519
    %v559 = vpop.f32.mrf.mxu0
    %v560 = vadd.f32 0.0, %v559
    %561 = vdwg.mxu0
    %562 = vmatpush.msra.mxu0 %v58
    %563 = vmatpush.msra.mxu0 %v57
    %564 = vmatpush.msra.mxu0 %v56
    %565 = vmatpush.msra.mxu0 %v55
    %566 = vmatpush.msra.mxu0 %v54
    %567 = vmatpush.msra.mxu0 %v53
    %568 = vmatpush.msra.mxu0 %v52
    %569 = vmatpush.msra.mxu0 %v51
    %570 = vmatpush.msra.mxu0 %v50
    %571 = vmatpush.msra.mxu0 %v49
    %572 = vmatpush.msra.mxu0 %v48
    %573 = vmatpush.msra.mxu0 %v47
    %574 = vmatpush.msra.mxu0 %v46
    %575 = vmatpush.msra.mxu0 %v45
    %576 = vmatpush.msra.mxu0 %v44
    %577 = vmatpush.msra.mxu0 %v43
    %578 = vmatmul.f32.gmra.mxu0 %v506
    %v579 = vpop.f32.mrf.mxu0
    %v580 = vadd.f32 %v539, %v579
    %581 = vmatmul.f32.gmra.mxu0 %v508
    %v582 = vpop.f32.mrf.mxu0
    %v583 = vadd.f32 %v542, %v582
    %584 = vmatmul.f32.gmra.mxu0 %v510
    %v585 = vpop.f32.mrf.mxu0
    %v586 = vadd.f32 %v545, %v585
    %587 = vmatmul.f32.gmra.mxu0 %v512
    %v588 = vpop.f32.mrf.mxu0
    %v589 = vadd.f32 %v548, %v588
    %590 = vmatmul.f32.gmra.mxu0 %v514
    %v591 = vpop.f32.mrf.mxu0
    %v592 = vadd.f32 %v551, %v591
    %593 = vmatmul.f32.gmra.mxu0 %v516
    %v594 = vpop.f32.mrf.mxu0
    %v595 = vadd.f32 %v554, %v594
    %596 = vmatmul.f32.gmra.mxu0 %v518
    %v597 = vpop.f32.mrf.mxu0
    %v598 = vadd.f32 %v557, %v597
    %599 = vmatmul.f32.gmra.mxu0 %v520
    %v600 = vpop.f32.mrf.mxu0
    %v601 = vadd.f32 %v560, %v600
    %602 = vdwg.mxu0
    %603 = vst.msk [vmem:[%s3] sm:$0xff] %vm65, %v580
    %604 = vst.msk [vmem:[%s3 + $0x8] sm:$0xff] %vm65, %v583
    %605 = vst.msk [vmem:[%s3 + $0x10] sm:$0xff] %vm65, %v586
    %606 = vst.msk [vmem:[%s3 + $0x18] sm:$0xff] %vm65, %v589
    %607 = vst.msk [vmem:[%s3 + $0x20] sm:$0xff] %vm65, %v592
    %608 = vst.msk [vmem:[%s3 + $0x28] sm:$0xff] %vm65, %v595
    %609 = vst.msk [vmem:[%s3 + $0x30] sm:$0xff] %vm65, %v598
    %610 = vst.msk [vmem:[%s3 + $0x38] sm:$0xff] %vm65, %v601
    %v611 = vsub.f32 %v580, %v19
    %v612 = vsub.f32 %v583, %v20
    %v613 = vsub.f32 %v586, %v21
    %v614 = vsub.f32 %v589, %v22
    %v615 = vsub.f32 %v592, %v23
    %v616 = vsub.f32 %v595, %v24
    %v617 = vsub.f32 %v598, %v25
    %v618 = vsub.f32 %v601, %v26
    %v619 = vmul.f32 %v611, %v611
    %v620 = vmul.f32 %v612, %v612
    %v621 = vmul.f32 %v613, %v613
    %v622 = vmul.f32 %v614, %v614
    %v623 = vmul.f32 %v615, %v615
    %v624 = vmul.f32 %v616, %v616
    %v625 = vmul.f32 %v617, %v617
    %v626 = vmul.f32 %v618, %v618
    %v627 = vsel %vm65, %v619, 0.0
    %v628 = vsel %vm65, %v620, 0.0
    %v629 = vadd.f32 %v627, %v628
    %v630 = vsel %vm65, %v621, 0.0
    %v631 = vadd.f32 %v629, %v630
    %v632 = vsel %vm65, %v622, 0.0
    %v633 = vadd.f32 %v631, %v632
    %v634 = vsel %vm65, %v623, 0.0
    %v635 = vadd.f32 %v633, %v634
    %v636 = vsel %vm65, %v624, 0.0
    %v637 = vadd.f32 %v635, %v636
    %v638 = vsel %vm65, %v625, 0.0
    %v639 = vadd.f32 %v637, %v638
    %v640 = vsel %vm65, %v626, 0.0
    %v641 = vadd.f32 %v639, %v640
    %642 = vadd.xlane.f32.xlu0 %v641
    %v643 = vpop.xlane.xlu0 %642
    %v644 = vrot.slane %v643, 4
    %v645 = vadd.f32 %v643, %v644
    %v646 = vrot.slane %v645, 2
    %v647 = vadd.f32 %v645, %v646
    %v648 = vrot.slane %v647, 1
    %v649 = vadd.f32 %v647, %v648
    %s650 = vtos %v649
    %v651 = vstv %s650
    %652 = vst [vmem:[#allocation4] sm:$0x1] %v651
    // Predicated region
    $region14: #{tpu_custom_call.1} parent=1 // pred_check
      _
    $region15: #{tpu_custom_call.1} parent=1 // pred_check_branch
      %654 = sbr.rel (0) target = $region17
    $region16: #{tpu_custom_call.1} parent=1 // pred_region
      _
    $region17: #{tpu_custom_call.1} parent=1 // pred_fallthru
      _
    // Predicated region
    $region18: #{tpu_custom_call.1} parent=1 // pred_check
      _
    $region19: #{tpu_custom_call.1} parent=1 // pred_check_branch
      %656 = sbr.rel (0) target = $region21
    $region20: #{tpu_custom_call.1} parent=1 // pred_region
      %658 = vsyncadd [#allocation3], 0
      %s660 = sshll.u32 [#allocation2], 4
      %s661 = int_to_ptr.vmem [resolvable:$true] %s660
      %s662 = sshll.u32 %s4, 4
      %s663 = int_to_ptr.hbm [resolvable:$true] %s662
      %665 = dma.vmem_to_hbm [thread:$0]  %s661, 16, %s663, [#allocation3]
    $region21: #{tpu_custom_call.1} parent=1 // pred_fallthru
      _
    // Predicated region
    $region22: #{tpu_custom_call.1} parent=1 // pred_check
      _
    $region23: #{tpu_custom_call.1} parent=1 // pred_check_branch
      %667 = sbr.rel (0) target = $region25
    $region24: #{tpu_custom_call.1} parent=1 // pred_region
      %669 = vsyncadd [#allocation5], 0
      %s671 = sshll.u32 [#allocation4], 4
      %s672 = int_to_ptr.vmem [resolvable:$true] %s671
      %s673 = sshll.u32 %s5, 4
      %s674 = int_to_ptr.hbm [resolvable:$true] %s673
      %676 = dma.vmem_to_hbm [thread:$0]  %s672, 16, %s674, [#allocation5]
    $region25: #{tpu_custom_call.1} parent=1 // pred_fallthru
      _
    // Predicated region
    $region26: #{tpu_custom_call.1} parent=1 // pred_check
      _
    $region27: #{tpu_custom_call.1} parent=1 // pred_check_branch
      %678 = sbr.rel (0) target = $region29
    $region28: #{tpu_custom_call.1} parent=1 // pred_region
      _
    $region29: #{tpu_custom_call.1} parent=1 // pred_fallthru
      _
    // Predicated region
    $region30: #{tpu_custom_call.1} parent=1 // pred_check
      _
    $region31: #{tpu_custom_call.1} parent=1 // pred_check_branch
      %680 = sbr.rel (0) target = $region33
    $region32: #{tpu_custom_call.1} parent=1 // pred_region
      %682 = dma.done [#allocation3], 16
    $region33: #{tpu_custom_call.1} parent=1 // pred_fallthru
      _
    // Predicated region
    $region34: #{tpu_custom_call.1} parent=1 // pred_check
      _
    $region35: #{tpu_custom_call.1} parent=1 // pred_check_branch
      %684 = sbr.rel (0) target = $region37
    $region36: #{tpu_custom_call.1} parent=1 // pred_region
      %686 = dma.done [#allocation5], 16
    $region37: #{tpu_custom_call.1} parent=1 // pred_fallthru
      _
    %687 = vsyncpa [#allocation3], 1
    %688 = vsyncpa [#allocation5], 1

</llo_original>
